<compile_context>
chip_gen: v7x
topology: tpu7x:2x2x1
jax: 0.10.0
libtpu: 0.0.40
codegen_flags: <defaults>
</compile_context>

<pallas_src>
import functools

import jax
import jax.numpy as jnp
from jax.experimental import pallas as pl
from jax.experimental.pallas import tpu as pltpu


def _receiver_kernel(x_ref, sig_ref, w1b_ref, w13_ref, w23_ref, w4_ref,
                     probas_ref, emb_ref, *, inv_temp):
    x_cat = x_ref[...]                                    # (TB, G*F)
    sig = sig_ref[...]                                    # (TB, V)

    # Embeddings for every game item, already in the flattened concat layout: (TB, G*E).
    emb_flat = jnp.dot(x_cat, w1b_ref[...], preferred_element_type=jnp.float32)
    emb_ref[...] = emb_flat.astype(emb_ref.dtype)         # single lane-dense store

    # h = cat([emb_0, ..., emb_{G-1}, h_s]) @ w3   ==   x_cat @ W13 + sig @ W23
    h = jnp.dot(x_cat, w13_ref[...], preferred_element_type=jnp.float32)
    h = h + jnp.dot(sig, w23_ref[...], preferred_element_type=jnp.float32)
    h = jax.nn.sigmoid(h)                                 # (TB, H)

    out = jnp.dot(h, w4_ref[...], preferred_element_type=jnp.float32) * inv_temp
    out = out - jnp.max(out, axis=1, keepdims=True)       # (TB, G)
    e = jnp.exp(out)
    probas_ref[...] = (e / jnp.sum(e, axis=1, keepdims=True)).astype(probas_ref.dtype)


def _round_up(n, m):
    return ((n + m - 1) // m) * m


def _plan_batch_tiling(batch, row_widths, *, max_tile=2048,
                       vmem_budget_bytes=12 * 1024 * 1024):
    """Pick (batch_tile, padded_batch).

    batch_tile is a multiple of 8, padded_batch a multiple of batch_tile.  The
    double-buffered per-row VMEM cost is estimated from the lane-padded widths of every
    batch-tiled block so the working set stays well under the scoped-VMEM limit on all of
    v5e / v6e / v7x (the weights are tiny and resident).
    """
    bytes_per_row = 2 * 4 * sum(_round_up(w, 128) for w in row_widths)  # x2 double-buffer
    budget_rows = max(8, vmem_budget_bytes // max(bytes_per_row, 1))
    tb = max(8, min(max_tile, (budget_rows // 8) * 8))
    b8 = _round_up(batch, 8)
    if b8 <= tb:
        if b8 >= 256:
            # Prefer >=2 grid steps once the batch is big enough: enables DMA/compute
            # pipelining and v7x dual-TensorCore sharding of the "parallel" batch axis.
            tb = max(8, ((b8 // 2) // 8) * 8)
        else:
            tb = b8
    b_pad = _round_up(b8, tb)
    return tb, b_pad


def informed_receiver_forward(x, signal, w1, w2, w3, w4, *, temp=1.0):
    """Forward pass of InformedReceiver.

    x      : (game_size, batch, feat_size)  (optionally with a trailing singleton dim)
    signal : (batch, vocab_size)            (optionally with a trailing singleton dim)
    w1..w4 : nn.Linear weights pre-transposed to (in_features, out_features).
    Returns (probas (B, G), emb (B, G, E)).
    """
    if x.ndim == 4 and x.shape[-1] == 1:
        x = x[..., 0]
    if signal.ndim == 3 and signal.shape[-1] == 1:
        signal = signal[..., 0]

    G, B, F = x.shape
    V = signal.shape[1]
    E = w1.shape[1]
    H = w3.shape[1]
    assert w1.shape == (F, E)
    assert w2.shape == (V, E)
    assert w3.shape == ((G + 1) * E, H)
    assert w4.shape == (H, G)

    f32 = jnp.float32
    x = x.astype(f32)
    signal = signal.astype(f32)

    # --- wrapper-side weight pre-composition (tiny, exact algebra) ---
    w1b = jnp.kron(jnp.eye(G, dtype=f32), w1.astype(f32))       # (G*F, G*E) block-diagonal
    w13 = w1b @ w3[:G * E, :].astype(f32)                       # (G*F, H)
    w23 = w2.astype(f32) @ w3[G * E:, :].astype(f32)            # (V, H)
    w4 = w4.astype(f32)

    # --- flatten x to (B, G*F): the concat layout the kernel consumes directly ---
    x_cat = jnp.transpose(x, (1, 0, 2)).reshape(B, G * F)

    # --- batch tiling / padding ---
    TB, B_pad = _plan_batch_tiling(B, (G * F, V, G * E, G))
    if B_pad != B:
        x_cat = jnp.pad(x_cat, ((0, B_pad - B), (0, 0)))
        signal = jnp.pad(signal, ((0, B_pad - B), (0, 0)))
    grid = (B_pad // TB,)

    kernel = functools.partial(_receiver_kernel, inv_temp=1.0 / float(temp))

    flops = 2 * B_pad * (G * F * G * E + G * F * H + V * H + H * G)
    transcendentals = B_pad * (H + G)
    bytes_accessed = 4 * (x_cat.size + signal.size + w1b.size + w13.size
                          + w23.size + w4.size + B_pad * G + B_pad * G * E)

    probas, emb_flat = pl.pallas_call(
        kernel,
        out_shape=(jax.ShapeDtypeStruct((B_pad, G), f32),
                   jax.ShapeDtypeStruct((B_pad, G * E), f32)),
        grid=grid,
        in_specs=[
            pl.BlockSpec((TB, G * F), lambda b: (b, 0)),      # x_cat batch tile
            pl.BlockSpec((TB, V), lambda b: (b, 0)),          # signal batch tile
            pl.BlockSpec((G * F, G * E), lambda b: (0, 0)),   # W1B (resident)
            pl.BlockSpec((G * F, H), lambda b: (0, 0)),       # W13 (resident)
            pl.BlockSpec((V, H), lambda b: (0, 0)),           # W23 (resident)
            pl.BlockSpec((H, G), lambda b: (0, 0)),           # w4  (resident)
        ],
        out_specs=(pl.BlockSpec((TB, G), lambda b: (b, 0)),
                   pl.BlockSpec((TB, G * E), lambda b: (b, 0))),
        compiler_params=pltpu.CompilerParams(
            dimension_semantics=("parallel",),
            vmem_limit_bytes=32 * 1024 * 1024),
        cost_estimate=pl.CostEstimate(flops=flops,
                                      transcendentals=transcendentals,
                                      bytes_accessed=bytes_accessed),
    )(x_cat, signal, w1b, w13, w23, w4)

    probas = probas[:B]
    emb = emb_flat[:B].reshape(B, G, E)
    return probas, emb


def _reference_forward(x, signal, w1, w2, w3, w4, temp=1.0):
    """Pure-JAX reference mirroring the PyTorch module exactly."""
    G = x.shape[0]
    embs = [x[i] @ w1 for i in range(G)]                 # each (B, E)
    emb = jnp.stack(embs, axis=1)                        # (B, G, E)
    h_s = signal @ w2                                    # (B, E)
    h = jnp.concatenate([emb[:, i, :] for i in range(G)] + [h_s], axis=1)
    h = jax.nn.sigmoid(h @ w3)
    out = (h @ w4) * (1.0 / temp)
    probas = jax.nn.softmax(out, axis=1)
    return probas, emb


if __name__ == "__main__":
    # Small shapes consistent with the module's forward.
    game_size = 2
    batch = 8
    feat_size = 16
    embedding_size = 32
    hidden_size = 32
    vocab_size = 16
    temp = 1.0

    key = jax.random.PRNGKey(0)
    kx, ks, k1, k2, k3, k4 = jax.random.split(key, 6)

    x = jax.random.normal(kx, (game_size, batch, feat_size), dtype=jnp.float32)
    signal = jax.random.normal(ks, (batch, vocab_size), dtype=jnp.float32)

    # Parameters: uniform(-0.08, 0.08), bias-free linears (stored as (in, out)).
    def uinit(k, shape):
        return jax.random.uniform(k, shape, jnp.float32, -0.08, 0.08)

    w1 = uinit(k1, (feat_size, embedding_size))
    w2 = uinit(k2, (vocab_size, embedding_size))
    w3 = uinit(k3, (embedding_size * game_size + embedding_size, hidden_size))
    w4 = uinit(k4, (hidden_size, game_size))

    probas, emb = informed_receiver_forward(x, signal, w1, w2, w3, w4, temp=temp)
    jax.block_until_ready((probas, emb))

    # Correctness check against the pure-JAX reference.  Tolerance accounts for the
    # pre-composed weight chain (different but exact associativity) and MXU rounding.
    ref_probas, ref_emb = _reference_forward(x, signal, w1, w2, w3, w4, temp=temp)
    assert probas.shape == (batch, game_size)
    assert emb.shape == (batch, game_size, embedding_size)
    assert jnp.allclose(probas, ref_probas, atol=1e-3, rtol=1e-3)
    assert jnp.allclose(emb, ref_emb, atol=1e-3, rtol=1e-3)

    print("KERNEL_OK")
</pallas_src>

<mosaic_0001>
module attributes {stable_mosaic.version = 11 : i64} {
  func.func @_receiver_kernel(%arg0: i32, %arg1: memref<8x32xf32, #tpu.memory_space<vmem>>, %arg2: memref<8x16xf32, #tpu.memory_space<vmem>>, %arg3: memref<32x64xf32, #tpu.memory_space<vmem>>, %arg4: memref<32x32xf32, #tpu.memory_space<vmem>>, %arg5: memref<16x32xf32, #tpu.memory_space<vmem>>, %arg6: memref<32x2xf32, #tpu.memory_space<vmem>>, %arg7: memref<8x2xf32, #tpu.memory_space<vmem>>, %arg8: memref<8x64xf32, #tpu.memory_space<vmem>>) attributes {dimension_semantics = [#tpu.dimension_semantics<parallel>], iteration_bounds = array<i64: 1>, scalar_prefetch = 0 : i64, scratch_operands = 0 : i64, tpu.core_type = #tpu.core_type<tc>, window_params = [{transform_indices = @transform_0, window_bounds = array<i64: 8, 32>}, {transform_indices = @transform_1, window_bounds = array<i64: 8, 16>}, {pipeline_mode = #tpu.pipeline_mode<synchronous>, transform_indices = @transform_2, window_bounds = array<i64: 32, 64>}, {pipeline_mode = #tpu.pipeline_mode<synchronous>, transform_indices = @transform_3, window_bounds = array<i64: 32, 32>}, {pipeline_mode = #tpu.pipeline_mode<synchronous>, transform_indices = @transform_4, window_bounds = array<i64: 16, 32>}, {pipeline_mode = #tpu.pipeline_mode<synchronous>, transform_indices = @transform_5, window_bounds = array<i64: 32, 2>}, {transform_indices = @transform_6, window_bounds = array<i64: 8, 2>}, {transform_indices = @transform_7, window_bounds = array<i64: 8, 64>}]} {
    %c0 = arith.constant 0 : index
    %c0_0 = arith.constant 0 : index
    %0 = vector.load %arg1[%c0, %c0_0] : memref<8x32xf32, #tpu.memory_space<vmem>>, vector<8x32xf32>
    %c0_1 = arith.constant 0 : index
    %c0_2 = arith.constant 0 : index
    %1 = vector.load %arg2[%c0_1, %c0_2] : memref<8x16xf32, #tpu.memory_space<vmem>>, vector<8x16xf32>
    %c0_3 = arith.constant 0 : index
    %c0_4 = arith.constant 0 : index
    %2 = vector.load %arg3[%c0_3, %c0_4] : memref<32x64xf32, #tpu.memory_space<vmem>>, vector<32x64xf32>
    %cst = arith.constant dense<0.000000e+00> : vector<8x64xf32>
    %3 = tpu.matmul %0, %2, %cst {dimension_numbers = #tpu.dot_dimension_numbers<[1], [0], [0], [1], [0, 0, 1, 1], [], []>} : vector<8x32xf32>, vector<32x64xf32>, vector<8x64xf32> -> vector<8x64xf32>
    %c0_5 = arith.constant 0 : index
    %c0_6 = arith.constant 0 : index
    %4 = vector.load %arg8[%c0_5, %c0_6] : memref<8x64xf32, #tpu.memory_space<vmem>>, vector<8x64xf32>
    tpu.vector_store %arg8[%c0_5, %c0_6], %3 {strides = array<i32>} : memref<8x64xf32, #tpu.memory_space<vmem>>, vector<8x64xf32>,
    %c0_7 = arith.constant 0 : index
    %c0_8 = arith.constant 0 : index
    %5 = vector.load %arg4[%c0_7, %c0_8] : memref<32x32xf32, #tpu.memory_space<vmem>>, vector<32x32xf32>
    %cst_9 = arith.constant dense<0.000000e+00> : vector<8x32xf32>
    %6 = tpu.matmul %0, %5, %cst_9 {dimension_numbers = #tpu.dot_dimension_numbers<[1], [0], [0], [1], [0, 0, 1, 1], [], []>} : vector<8x32xf32>, vector<32x32xf32>, vector<8x32xf32> -> vector<8x32xf32>
    %c0_10 = arith.constant 0 : index
    %c0_11 = arith.constant 0 : index
    %7 = vector.load %arg5[%c0_10, %c0_11] : memref<16x32xf32, #tpu.memory_space<vmem>>, vector<16x32xf32>
    %cst_12 = arith.constant dense<0.000000e+00> : vector<8x32xf32>
    %8 = tpu.matmul %1, %7, %cst_12 {dimension_numbers = #tpu.dot_dimension_numbers<[1], [0], [0], [1], [0, 0, 1, 1], [], []>} : vector<8x16xf32>, vector<16x32xf32>, vector<8x32xf32> -> vector<8x32xf32>
    %9 = arith.addf %6, %8 : vector<8x32xf32>
    %10 = arith.negf %9 : vector<8x32xf32>
    %11 = math.exp %10 : vector<8x32xf32>
    %cst_13 = arith.constant 1.000000e+00 : f32
    %12 = vector.broadcast %cst_13 : f32 to vector<8x32xf32>
    %13 = arith.addf %12, %11 : vector<8x32xf32>
    %14 = arith.divf %12, %13 : vector<8x32xf32>
    %c0_14 = arith.constant 0 : index
    %c0_15 = arith.constant 0 : index
    %15 = vector.load %arg6[%c0_14, %c0_15] : memref<32x2xf32, #tpu.memory_space<vmem>>, vector<32x2xf32>
    %cst_16 = arith.constant dense<0.000000e+00> : vector<8x2xf32>
    %16 = tpu.matmul %14, %15, %cst_16 {dimension_numbers = #tpu.dot_dimension_numbers<[1], [0], [0], [1], [0, 0, 1, 1], [], []>} : vector<8x32xf32>, vector<32x2xf32>, vector<8x2xf32> -> vector<8x2xf32>
    %cst_17 = arith.constant 1.000000e+00 : f32
    %17 = vector.broadcast %cst_17 : f32 to vector<8x2xf32>
    %18 = arith.mulf %16, %17 : vector<8x2xf32>
    %cst_18 = arith.constant dense<0xFF800000> : vector<8xf32>
    %19 = vector.multi_reduction <maximumf>, %18, %cst_18 [1] : vector<8x2xf32> to vector<8xf32>
    %20 = vector.shape_cast %19 : vector<8xf32> to vector<8x1xf32>
    %21 = vector.broadcast %20 : vector<8x1xf32> to vector<8x2xf32>
    %22 = arith.subf %18, %21 : vector<8x2xf32>
    %23 = math.exp %22 : vector<8x2xf32>
    %cst_19 = arith.constant dense<0.000000e+00> : vector<8xf32>
    %24 = vector.multi_reduction <add>, %23, %cst_19 [1] : vector<8x2xf32> to vector<8xf32>
    %25 = vector.shape_cast %24 : vector<8xf32> to vector<8x1xf32>
    %26 = vector.broadcast %25 : vector<8x1xf32> to vector<8x2xf32>
    %27 = arith.divf %23, %26 : vector<8x2xf32>
    %c0_20 = arith.constant 0 : index
    %c0_21 = arith.constant 0 : index
    %28 = vector.load %arg7[%c0_20, %c0_21] : memref<8x2xf32, #tpu.memory_space<vmem>>, vector<8x2xf32>
    tpu.vector_store %arg7[%c0_20, %c0_21], %27 {strides = array<i32>} : memref<8x2xf32, #tpu.memory_space<vmem>>, vector<8x2xf32>,
    return
  }
  func.func @transform_0(%arg0: i32) -> (i32, i32) {
    %c0_i32 = arith.constant 0 : i32
    %c0_i32_0 = arith.constant 0 : i32
    return %arg0, %c0_i32 : i32, i32
  }
  func.func @transform_1(%arg0: i32) -> (i32, i32) {
    %c0_i32 = arith.constant 0 : i32
    %c0_i32_0 = arith.constant 0 : i32
    return %arg0, %c0_i32 : i32, i32
  }
  func.func @transform_2(%arg0: i32) -> (i32, i32) {
    %c0_i32 = arith.constant 0 : i32
    %c0_i32_0 = arith.constant 0 : i32
    %c0_i32_1 = arith.constant 0 : i32
    return %c0_i32, %c0_i32_0 : i32, i32
  }
  func.func @transform_3(%arg0: i32) -> (i32, i32) {
    %c0_i32 = arith.constant 0 : i32
    %c0_i32_0 = arith.constant 0 : i32
    %c0_i32_1 = arith.constant 0 : i32
    return %c0_i32, %c0_i32_0 : i32, i32
  }
  func.func @transform_4(%arg0: i32) -> (i32, i32) {
    %c0_i32 = arith.constant 0 : i32
    %c0_i32_0 = arith.constant 0 : i32
    %c0_i32_1 = arith.constant 0 : i32
    return %c0_i32, %c0_i32_0 : i32, i32
  }
  func.func @transform_5(%arg0: i32) -> (i32, i32) {
    %c0_i32 = arith.constant 0 : i32
    %c0_i32_0 = arith.constant 0 : i32
    %c0_i32_1 = arith.constant 0 : i32
    return %c0_i32, %c0_i32_0 : i32, i32
  }
  func.func @transform_6(%arg0: i32) -> (i32, i32) {
    %c0_i32 = arith.constant 0 : i32
    %c0_i32_0 = arith.constant 0 : i32
    return %arg0, %c0_i32 : i32, i32
  }
  func.func @transform_7(%arg0: i32) -> (i32, i32) {
    %c0_i32 = arith.constant 0 : i32
    %c0_i32_0 = arith.constant 0 : i32
    return %arg0, %c0_i32 : i32, i32
  }
}

</mosaic_0001>

<llo_original>
// kernel: tpu_custom_call.1
$region0: #{tpu_custom_call.1}
  #allocation0 [shape = 'u32[]', space=smem, size = 0x4, offset = 0x4, fixed_abs, tag = 'smem constant byte address 0x4 - core index']
  #allocation1 [shape = 'u32[144,128]{1,0:T(1,128)}', space=vmem, size = 0x12000, scoped, tag = 'internal scratch']
  %s0 = inlined_call_operand.hbm [shape: f32[8,32], index: 0, kind: input, shape index: {}]
  %s1 = inlined_call_operand.hbm [shape: f32[8,16], index: 1, kind: input, shape index: {}]
  %s2 = inlined_call_operand.vmem [shape: f32[32,64], index: 2, kind: input, shape index: {}]
  %s3 = inlined_call_operand.hbm [shape: f32[32,32], index: 3, kind: input, shape index: {}]
  %s4 = inlined_call_operand.vmem [shape: f32[16,32], index: 4, kind: input, shape index: {}]
  %s5 = inlined_call_operand.vmem [shape: f32[32,2], index: 5, kind: input, shape index: {}]
  %s6 = inlined_call_operand.vmem [shape: f32[8,2], index: 6, kind: output, shape index: {0}]
  %s7 = inlined_call_operand.hbm [shape: f32[8,64], index: 7, kind: output, shape index: {1}]
  %8 = xla_tuple %s6, %s7
  %s9 = sld [smem:[#allocation0]]
  $region54: #{tpu_custom_call.1} parent=0
    _
  %s11 = ssub.s32 1, %s9
  %s12 = scalar_select 0, %s11, %s9
  $region1: #{tpu_custom_call.1} parent=0
    #allocation2 [shape = 'u8[4096]{0}', space=vmem, size = 0x1000, scoped, tag = 'input window, operand 0, single buffered']
    #allocation3 [shape = 's32[1]{0}', space=sflag, size = 0x4, scoped, tag = 'scoped memory for tpu_custom_call.1']
    #allocation4 [shape = 's32[1]{0}', space=sflag, size = 0x4, scoped, tag = 'scoped memory for tpu_custom_call.1']
    #allocation5 [shape = 'u8[4096]{0}', space=vmem, size = 0x1000, scoped, tag = 'input window, operand 1, single buffered']
    #allocation6 [shape = 's32[1]{0}', space=sflag, size = 0x4, scoped, tag = 'scoped memory for tpu_custom_call.1']
    #allocation7 [shape = 'u8[16384]{0}', space=vmem, size = 0x4000, scoped, tag = 'input window, operand 3, single buffered']
    #allocation8 [shape = 'u8[4096]{0}', space=vmem, size = 0x1000, scoped, tag = 'output window, operand 1, single buffered']
    %13 = vsyncpa [#allocation3], 0
    %14 = vsyncpa [#allocation6], 0
    %15 = vsyncpa [#allocation4], 0
    // Predicated region
    $region2: #{tpu_custom_call.1} parent=1 // pred_check
      _
    $region3: #{tpu_custom_call.1} parent=1 // pred_check_branch
      %17 = sbr.rel (0) target = $region5
    $region4: #{tpu_custom_call.1} parent=1 // pred_region
      %s19 = ssub.s32 128, 128
      %20 = vsyncadd [#allocation3], %s19
      %s22 = sshll.u32 [#allocation2], 4
      %s23 = int_to_ptr.vmem [resolvable:$true] %s22
      %25 = dma.hbm_to_vmem [thread:$0]  %s0, 128, %s23, [#allocation3]
    $region5: #{tpu_custom_call.1} parent=1 // pred_fallthru
      _
    // Predicated region
    $region6: #{tpu_custom_call.1} parent=1 // pred_check
      _
    $region7: #{tpu_custom_call.1} parent=1 // pred_check_branch
      %27 = sbr.rel (0) target = $region9
    $region8: #{tpu_custom_call.1} parent=1 // pred_region
      %s29 = ssub.s32 128, 128
      %30 = vsyncadd [#allocation6], %s29
      %s32 = sshll.u32 [#allocation5], 4
      %s33 = int_to_ptr.vmem [resolvable:$true] %s32
      %35 = dma.hbm_to_vmem [thread:$0]  %s1, 128, %s33, [#allocation6]
    $region9: #{tpu_custom_call.1} parent=1 // pred_fallthru
      _
    // Predicated region
    $region10: #{tpu_custom_call.1} parent=1 // pred_check
      _
    $region11: #{tpu_custom_call.1} parent=1 // pred_check_branch
      %37 = sbr.rel (0) target = $region13
    $region12: #{tpu_custom_call.1} parent=1 // pred_region
      _
    $region13: #{tpu_custom_call.1} parent=1 // pred_fallthru
      _
    // Predicated region
    $region14: #{tpu_custom_call.1} parent=1 // pred_check
      _
    $region15: #{tpu_custom_call.1} parent=1 // pred_check_branch
      %39 = sbr.rel (0) target = $region17
    $region16: #{tpu_custom_call.1} parent=1 // pred_region
      %s41 = ssub.s32 512, 512
      %42 = vsyncadd [#allocation6], %s41
      %s43 = sshll.u32 [#allocation7], 4
      %s44 = int_to_ptr.vmem [resolvable:$true] %s43
      %49 = dma.hbm_to_vmem [thread:$0]  %s3, 512, %s44, [#allocation6], 128, 128, 8
    $region17: #{tpu_custom_call.1} parent=1 // pred_fallthru
      _
    // Predicated region
    $region18: #{tpu_custom_call.1} parent=1 // pred_check
      _
    $region19: #{tpu_custom_call.1} parent=1 // pred_check_branch
      %51 = sbr.rel (0) target = $region21
    $region20: #{tpu_custom_call.1} parent=1 // pred_region
      _
    $region21: #{tpu_custom_call.1} parent=1 // pred_fallthru
      _
    // Predicated region
    $region22: #{tpu_custom_call.1} parent=1 // pred_check
      _
    $region23: #{tpu_custom_call.1} parent=1 // pred_check_branch
      %53 = sbr.rel (0) target = $region25
    $region24: #{tpu_custom_call.1} parent=1 // pred_region
      _
    $region25: #{tpu_custom_call.1} parent=1 // pred_fallthru
      _
    // Predicated region
    $region26: #{tpu_custom_call.1} parent=1 // pred_check
      _
    $region27: #{tpu_custom_call.1} parent=1 // pred_check_branch
      %55 = sbr.rel (0) target = $region29
    $region28: #{tpu_custom_call.1} parent=1 // pred_region
      %56 = dma.done [#allocation3], 128
    $region29: #{tpu_custom_call.1} parent=1 // pred_fallthru
      _
    // Predicated region
    $region30: #{tpu_custom_call.1} parent=1 // pred_check
      _
    $region31: #{tpu_custom_call.1} parent=1 // pred_check_branch
      %58 = sbr.rel (0) target = $region33
    $region32: #{tpu_custom_call.1} parent=1 // pred_region
      %59 = dma.done [#allocation6], 128
    $region33: #{tpu_custom_call.1} parent=1 // pred_fallthru
      _
    // Predicated region
    $region34: #{tpu_custom_call.1} parent=1 // pred_check
      _
    $region35: #{tpu_custom_call.1} parent=1 // pred_check_branch
      %61 = sbr.rel (0) target = $region37
    $region36: #{tpu_custom_call.1} parent=1 // pred_region
      %62 = dma.done [#allocation6], 512
    $region37: #{tpu_custom_call.1} parent=1 // pred_fallthru
      _
    %v63 = vld [vmem:[#allocation2] sm:$0xff]
    %v64 = vld [vmem:[#allocation5] sm:$0xff]
    %v65 = vld [vmem:[%s2] sm:$0xff]
    %v66 = vld [vmem:[%s2 + $0x8] sm:$0xff]
    %v67 = vld [vmem:[%s2 + $0x10] sm:$0xff]
    %v68 = vld [vmem:[%s2 + $0x18] sm:$0xff]
    %vm69 = vcmask 261120
    %v71 = vsel %vm69, %v63, 0
    %73 = vmatprep.subr.mxu0 0.0
    %74 = vmatpush1.msra.mxu0 %v65
    %75 = vmatprep.subr.mxu0 0.0
    %76 = vmatpush1.msra.mxu0 %v66
    %77 = vmatprep.subr.mxu0 0.0
    %78 = vmatpush1.msra.mxu0 %v67
    %79 = vmatprep.subr.mxu0 0.0
    %80 = vmatpush1.msra.mxu0 %v68
    %81 = vmatprep.subr.mxu0 0.0
    %82 = vmatpush1.msra.mxu0 0.0
    %83 = vmatprep.subr.mxu0 0.0
    %84 = vmatpush1.msra.mxu0 0.0
    %85 = vmatprep.subr.mxu0 0.0
    %86 = vmatpush1.msra.mxu0 0.0
    %87 = vmatprep.subr.mxu0 0.0
    %88 = vmatpush1.msra.mxu0 0.0
    %89 = vmatprep.subr.mxu0 0.0
    %90 = vmatpush1.msra.mxu0 0.0
    %91 = vmatprep.subr.mxu0 0.0
    %92 = vmatpush1.msra.mxu0 0.0
    %93 = vmatprep.subr.mxu0 0.0
    %94 = vmatpush1.msra.mxu0 0.0
    %95 = vmatprep.subr.mxu0 0.0
    %96 = vmatpush1.msra.mxu0 0.0
    %97 = vmatprep.subr.mxu0 0.0
    %98 = vmatpush1.msra.mxu0 0.0
    %99 = vmatprep.subr.mxu0 0.0
    %100 = vmatpush1.msra.mxu0 0.0
    %101 = vmatprep.subr.mxu0 0.0
    %102 = vmatpush1.msra.mxu0 0.0
    %103 = vmatprep.subr.mxu0 0.0
    %104 = vmatpush1.msra.mxu0 0.0
    %105 = vmatprep.subr.mxu0 0.0
    %106 = vmatpush1.msra.mxu0 0.0
    %107 = vmatprep.subr.mxu0 0.0
    %108 = vmatpush1.msra.mxu0 0.0
    %109 = vmatprep.subr.mxu0 0.0
    %110 = vmatpush1.msra.mxu0 0.0
    %111 = vmatprep.subr.mxu0 0.0
    %112 = vmatpush1.msra.mxu0 0.0
    %113 = vmatprep.subr.mxu0 0.0
    %114 = vmatpush1.msra.mxu0 0.0
    %115 = vmatprep.subr.mxu0 0.0
    %116 = vmatpush1.msra.mxu0 0.0
    %117 = vmatprep.subr.mxu0 0.0
    %118 = vmatpush1.msra.mxu0 0.0
    %119 = vmatprep.subr.mxu0 0.0
    %120 = vmatpush1.msra.mxu0 0.0
    %121 = vmatprep.subr.mxu0 0.0
    %122 = vmatpush1.msra.mxu0 0.0
    %123 = vmatprep.subr.mxu0 0.0
    %124 = vmatpush1.msra.mxu0 0.0
    %125 = vmatprep.subr.mxu0 0.0
    %126 = vmatpush1.msra.mxu0 0.0
    %127 = vmatprep.subr.mxu0 0.0
    %128 = vmatpush1.msra.mxu0 0.0
    %129 = vmatprep.subr.mxu0 0.0
    %130 = vmatpush1.msra.mxu0 0.0
    %131 = vmatprep.subr.mxu0 0.0
    %132 = vmatpush1.msra.mxu0 0.0
    %133 = vmatprep.subr.mxu0 0.0
    %134 = vmatpush1.msra.mxu0 0.0
    %135 = vmatprep.subr.mxu0 0.0
    %136 = vmatpush1.msra.mxu0 0.0
    %137 = vmatprep.mubr.f32.mxu0 0.0
    %138 = vmatmul.mubr.f32.gmra.mrb[0].mxu0 %v71
    %v139 = vpop.f32.mrb[0].mxu0
    %v140 = vadd.f32 0.0, %v139
    %v141 = vpop.f32.mrb[0].mxu0
    %142 = vdwg.mxu0
    %vm143 = vcmask 523264
    %144 = vst.msk [vmem:[#allocation8] sm:$0xff] %vm143, %v140
    %v145 = vld [vmem:[#allocation7] sm:$0xff]
    %v146 = vld [vmem:[#allocation7 + $0x8] sm:$0xff]
    %v147 = vld [vmem:[#allocation7 + $0x10] sm:$0xff]
    %v148 = vld [vmem:[#allocation7 + $0x18] sm:$0xff]
    %v149 = vld [vmem:[%s4] sm:$0xff]
    %v150 = vld [vmem:[%s4 + $0x8] sm:$0xff]
    %vm151 = vcmask 130048
    %v153 = vsel %vm151, %v64, 0
    %155 = vmatprep.subr.mxu0 0.0
    %156 = vmatpush1.msra.mxu0 %v149
    %157 = vmatprep.subr.mxu0 0.0
    %158 = vmatpush1.msra.mxu0 %v150
    %159 = vmatprep.subr.mxu0 0.0
    %160 = vmatpush1.msra.mxu0 0.0
    %161 = vmatprep.subr.mxu0 0.0
    %162 = vmatpush1.msra.mxu0 0.0
    %163 = vmatprep.subr.mxu0 0.0
    %164 = vmatpush1.msra.mxu0 0.0
    %165 = vmatprep.subr.mxu0 0.0
    %166 = vmatpush1.msra.mxu0 0.0
    %167 = vmatprep.subr.mxu0 0.0
    %168 = vmatpush1.msra.mxu0 0.0
    %169 = vmatprep.subr.mxu0 0.0
    %170 = vmatpush1.msra.mxu0 0.0
    %171 = vmatprep.subr.mxu0 0.0
    %172 = vmatpush1.msra.mxu0 0.0
    %173 = vmatprep.subr.mxu0 0.0
    %174 = vmatpush1.msra.mxu0 0.0
    %175 = vmatprep.subr.mxu0 0.0
    %176 = vmatpush1.msra.mxu0 0.0
    %177 = vmatprep.subr.mxu0 0.0
    %178 = vmatpush1.msra.mxu0 0.0
    %179 = vmatprep.subr.mxu0 0.0
    %180 = vmatpush1.msra.mxu0 0.0
    %181 = vmatprep.subr.mxu0 0.0
    %182 = vmatpush1.msra.mxu0 0.0
    %183 = vmatprep.subr.mxu0 0.0
    %184 = vmatpush1.msra.mxu0 0.0
    %185 = vmatprep.subr.mxu0 0.0
    %186 = vmatpush1.msra.mxu0 0.0
    %187 = vmatprep.subr.mxu0 0.0
    %188 = vmatpush1.msra.mxu0 0.0
    %189 = vmatprep.subr.mxu0 0.0
    %190 = vmatpush1.msra.mxu0 0.0
    %191 = vmatprep.subr.mxu0 0.0
    %192 = vmatpush1.msra.mxu0 0.0
    %193 = vmatprep.subr.mxu0 0.0
    %194 = vmatpush1.msra.mxu0 0.0
    %195 = vmatprep.subr.mxu0 0.0
    %196 = vmatpush1.msra.mxu0 0.0
    %197 = vmatprep.subr.mxu0 0.0
    %198 = vmatpush1.msra.mxu0 0.0
    %199 = vmatprep.subr.mxu0 0.0
    %200 = vmatpush1.msra.mxu0 0.0
    %201 = vmatprep.subr.mxu0 0.0
    %202 = vmatpush1.msra.mxu0 0.0
    %203 = vmatprep.subr.mxu0 0.0
    %204 = vmatpush1.msra.mxu0 0.0
    %205 = vmatprep.subr.mxu0 0.0
    %206 = vmatpush1.msra.mxu0 0.0
    %207 = vmatprep.subr.mxu0 0.0
    %208 = vmatpush1.msra.mxu0 0.0
    %209 = vmatprep.subr.mxu0 0.0
    %210 = vmatpush1.msra.mxu0 0.0
    %211 = vmatprep.subr.mxu0 0.0
    %212 = vmatpush1.msra.mxu0 0.0
    %213 = vmatprep.subr.mxu0 0.0
    %214 = vmatpush1.msra.mxu0 0.0
    %215 = vmatprep.subr.mxu0 0.0
    %216 = vmatpush1.msra.mxu0 0.0
    %217 = vmatprep.subr.mxu0 0.0
    %218 = vmatpush1.msra.mxu0 0.0
    %219 = vmatprep.mubr.f32.mxu0 0.0
    %220 = vmatmul.mubr.f32.gmra.mrb[0].mxu0 %v153
    %v221 = vpop.f32.mrb[0].mxu0
    %v222 = vadd.f32 0.0, %v221
    %v223 = vpop.f32.mrb[0].mxu0
    %224 = vdwg.mxu0
    %225 = vmatprep.subr.mxu0 0.0
    %226 = vmatpush1.msra.mxu0 %v145
    %227 = vmatprep.subr.mxu0 0.0
    %228 = vmatpush1.msra.mxu0 %v146
    %229 = vmatprep.subr.mxu0 0.0
    %230 = vmatpush1.msra.mxu0 %v147
    %231 = vmatprep.subr.mxu0 0.0
    %232 = vmatpush1.msra.mxu0 %v148
    %233 = vmatprep.subr.mxu0 0.0
    %234 = vmatpush1.msra.mxu0 0.0
    %235 = vmatprep.subr.mxu0 0.0
    %236 = vmatpush1.msra.mxu0 0.0
    %237 = vmatprep.subr.mxu0 0.0
    %238 = vmatpush1.msra.mxu0 0.0
    %239 = vmatprep.subr.mxu0 0.0
    %240 = vmatpush1.msra.mxu0 0.0
    %241 = vmatprep.subr.mxu0 0.0
    %242 = vmatpush1.msra.mxu0 0.0
    %243 = vmatprep.subr.mxu0 0.0
    %244 = vmatpush1.msra.mxu0 0.0
    %245 = vmatprep.subr.mxu0 0.0
    %246 = vmatpush1.msra.mxu0 0.0
    %247 = vmatprep.subr.mxu0 0.0
    %248 = vmatpush1.msra.mxu0 0.0
    %249 = vmatprep.subr.mxu0 0.0
    %250 = vmatpush1.msra.mxu0 0.0
    %251 = vmatprep.subr.mxu0 0.0
    %252 = vmatpush1.msra.mxu0 0.0
    %253 = vmatprep.subr.mxu0 0.0
    %254 = vmatpush1.msra.mxu0 0.0
    %255 = vmatprep.subr.mxu0 0.0
    %256 = vmatpush1.msra.mxu0 0.0
    %257 = vmatprep.subr.mxu0 0.0
    %258 = vmatpush1.msra.mxu0 0.0
    %259 = vmatprep.subr.mxu0 0.0
    %260 = vmatpush1.msra.mxu0 0.0
    %261 = vmatprep.subr.mxu0 0.0
    %262 = vmatpush1.msra.mxu0 0.0
    %263 = vmatprep.subr.mxu0 0.0
    %264 = vmatpush1.msra.mxu0 0.0
    %265 = vmatprep.subr.mxu0 0.0
    %266 = vmatpush1.msra.mxu0 0.0
    %267 = vmatprep.subr.mxu0 0.0
    %268 = vmatpush1.msra.mxu0 0.0
    %269 = vmatprep.subr.mxu0 0.0
    %270 = vmatpush1.msra.mxu0 0.0
    %271 = vmatprep.subr.mxu0 0.0
    %272 = vmatpush1.msra.mxu0 0.0
    %273 = vmatprep.subr.mxu0 0.0
    %274 = vmatpush1.msra.mxu0 0.0
    %275 = vmatprep.subr.mxu0 0.0
    %276 = vmatpush1.msra.mxu0 0.0
    %277 = vmatprep.subr.mxu0 0.0
    %278 = vmatpush1.msra.mxu0 0.0
    %279 = vmatprep.subr.mxu0 0.0
    %280 = vmatpush1.msra.mxu0 0.0
    %281 = vmatprep.subr.mxu0 0.0
    %282 = vmatpush1.msra.mxu0 0.0
    %283 = vmatprep.subr.mxu0 0.0
    %284 = vmatpush1.msra.mxu0 0.0
    %285 = vmatprep.subr.mxu0 0.0
    %286 = vmatpush1.msra.mxu0 0.0
    %287 = vmatprep.subr.mxu0 0.0
    %288 = vmatpush1.msra.mxu0 0.0
    %289 = vmatprep.mubr.f32.mxu0 0.0
    %290 = vmatmul.mubr.f32.gmra.mrb[0].mxu0 %v71
    %v291 = vpop.f32.mrb[0].mxu0
    %v292 = vadd.f32 %v222, %v291
    %v293 = vpop.f32.mrb[0].mxu0
    %294 = vdwg.mxu0
    %v295 = vxor.u32 %v292, 2147483648
    %v296 = vmul.f32 %v295, 1.442695
    %v297 = vpow.pop %v296
    %v298 = vadd.f32 %v297, 1.0
    %v299 = vrcp.pop %v298
    %v300 = vmul.f32 1.0, %v299
    %v301 = vld [vmem:[%s5] sm:$0xff]
    %v302 = vld [vmem:[%s5 + $0x8] sm:$0xff]
    %v303 = vld [vmem:[%s5 + $0x10] sm:$0xff]
    %v304 = vld [vmem:[%s5 + $0x18] sm:$0xff]
    %v306 = vsel %vm69, %v300, 0
    %308 = vmatprep.subr.mxu0 0.0
    %309 = vmatpush1.msra.mxu0 %v301
    %310 = vmatprep.subr.mxu0 0.0
    %311 = vmatpush1.msra.mxu0 %v302
    %312 = vmatprep.subr.mxu0 0.0
    %313 = vmatpush1.msra.mxu0 %v303
    %314 = vmatprep.subr.mxu0 0.0
    %315 = vmatpush1.msra.mxu0 %v304
    %316 = vmatprep.subr.mxu0 0.0
    %317 = vmatpush1.msra.mxu0 0.0
    %318 = vmatprep.subr.mxu0 0.0
    %319 = vmatpush1.msra.mxu0 0.0
    %320 = vmatprep.subr.mxu0 0.0
    %321 = vmatpush1.msra.mxu0 0.0
    %322 = vmatprep.subr.mxu0 0.0
    %323 = vmatpush1.msra.mxu0 0.0
    %324 = vmatprep.subr.mxu0 0.0
    %325 = vmatpush1.msra.mxu0 0.0
    %326 = vmatprep.subr.mxu0 0.0
    %327 = vmatpush1.msra.mxu0 0.0
    %328 = vmatprep.subr.mxu0 0.0
    %329 = vmatpush1.msra.mxu0 0.0
    %330 = vmatprep.subr.mxu0 0.0
    %331 = vmatpush1.msra.mxu0 0.0
    %332 = vmatprep.subr.mxu0 0.0
    %333 = vmatpush1.msra.mxu0 0.0
    %334 = vmatprep.subr.mxu0 0.0
    %335 = vmatpush1.msra.mxu0 0.0
    %336 = vmatprep.subr.mxu0 0.0
    %337 = vmatpush1.msra.mxu0 0.0
    %338 = vmatprep.subr.mxu0 0.0
    %339 = vmatpush1.msra.mxu0 0.0
    %340 = vmatprep.subr.mxu0 0.0
    %341 = vmatpush1.msra.mxu0 0.0
    %342 = vmatprep.subr.mxu0 0.0
    %343 = vmatpush1.msra.mxu0 0.0
    %344 = vmatprep.subr.mxu0 0.0
    %345 = vmatpush1.msra.mxu0 0.0
    %346 = vmatprep.subr.mxu0 0.0
    %347 = vmatpush1.msra.mxu0 0.0
    %348 = vmatprep.subr.mxu0 0.0
    %349 = vmatpush1.msra.mxu0 0.0
    %350 = vmatprep.subr.mxu0 0.0
    %351 = vmatpush1.msra.mxu0 0.0
    %352 = vmatprep.subr.mxu0 0.0
    %353 = vmatpush1.msra.mxu0 0.0
    %354 = vmatprep.subr.mxu0 0.0
    %355 = vmatpush1.msra.mxu0 0.0
    %356 = vmatprep.subr.mxu0 0.0
    %357 = vmatpush1.msra.mxu0 0.0
    %358 = vmatprep.subr.mxu0 0.0
    %359 = vmatpush1.msra.mxu0 0.0
    %360 = vmatprep.subr.mxu0 0.0
    %361 = vmatpush1.msra.mxu0 0.0
    %362 = vmatprep.subr.mxu0 0.0
    %363 = vmatpush1.msra.mxu0 0.0
    %364 = vmatprep.subr.mxu0 0.0
    %365 = vmatpush1.msra.mxu0 0.0
    %366 = vmatprep.subr.mxu0 0.0
    %367 = vmatpush1.msra.mxu0 0.0
    %368 = vmatprep.subr.mxu0 0.0
    %369 = vmatpush1.msra.mxu0 0.0
    %370 = vmatprep.subr.mxu0 0.0
    %371 = vmatpush1.msra.mxu0 0.0
    %372 = vmatprep.mubr.f32.mxu0 0.0
    %373 = vmatmul.mubr.f32.gmra.mrb[0].mxu0 %v306
    %v374 = vpop.f32.mrb[0].mxu0
    %v375 = vadd.f32 0.0, %v374
    %v376 = vpop.f32.mrb[0].mxu0
    %377 = vdwg.mxu0
    %vm378 = vcmask 15360
    %v379 = vsel %vm378, %v375, -inf
    %380 = vmax.xlane.f32.xlu0 %v379
    %v381 = vpop.xlane.xlu0 %380
    %v382 = vsub.f32 %v375, %v381
    %v383 = vmul.f32 %v382, 1.442695
    %v384 = vpow.pop %v383
    %v385 = vsel %vm378, %v384, 0.0
    %386 = vadd.xlane.f32.xlu0 %v385
    %v387 = vpop.xlane.xlu0 %386
    %v388 = vrcp.pop %v387
    %v389 = vmul.f32 %v384, %v388
    %390 = vst.msk [vmem:[%s6] sm:$0xff] %vm378, %v389
    // Predicated region
    $region38: #{tpu_custom_call.1} parent=1 // pred_check
      _
    $region39: #{tpu_custom_call.1} parent=1 // pred_check_branch
      %392 = sbr.rel (0) target = $region41
    $region40: #{tpu_custom_call.1} parent=1 // pred_region
      _
    $region41: #{tpu_custom_call.1} parent=1 // pred_fallthru
      _
    // Predicated region
    $region42: #{tpu_custom_call.1} parent=1 // pred_check
      _
    $region43: #{tpu_custom_call.1} parent=1 // pred_check_branch
      %394 = sbr.rel (0) target = $region45
    $region44: #{tpu_custom_call.1} parent=1 // pred_region
      %s396 = ssub.s32 128, 128
      %397 = vsyncadd [#allocation4], %s396
      %s399 = sshll.u32 [#allocation8], 4
      %s400 = int_to_ptr.vmem [resolvable:$true] %s399
      %402 = dma.vmem_to_hbm [thread:$0]  %s400, 128, %s7, [#allocation4]
    $region45: #{tpu_custom_call.1} parent=1 // pred_fallthru
      _
    // Predicated region
    $region46: #{tpu_custom_call.1} parent=1 // pred_check
      _
    $region47: #{tpu_custom_call.1} parent=1 // pred_check_branch
      %404 = sbr.rel (0) target = $region49
    $region48: #{tpu_custom_call.1} parent=1 // pred_region
      _
    $region49: #{tpu_custom_call.1} parent=1 // pred_fallthru
      _
    // Predicated region
    $region50: #{tpu_custom_call.1} parent=1 // pred_check
      _
    $region51: #{tpu_custom_call.1} parent=1 // pred_check_branch
      %406 = sbr.rel (0) target = $region53
    $region52: #{tpu_custom_call.1} parent=1 // pred_region
      %407 = dma.done [#allocation4], 128
    $region53: #{tpu_custom_call.1} parent=1 // pred_fallthru
      _
    %408 = vsyncpa [#allocation3], 1
    %409 = vsyncpa [#allocation6], 1
    %410 = vsyncpa [#allocation4], 1

</llo_original>
